<compile_context>
chip_gen: v6e
topology: v6e:2x2x1
jax: 0.10.0
libtpu: 0.0.40
codegen_flags: <defaults>
</compile_context>

<pallas_src>
import functools

import jax
import jax.numpy as jnp
from jax.experimental import pallas as pl
from jax.experimental.pallas import tpu as pltpu


def _mm_plus_mm_kernel(a_ref, b_ref, c_ref, d_ref, o_ref, acc_ref):
    """Grid = (M/tm, N/tn, K/tk); k is the (last, 'arbitrary') reduction axis."""
    k = pl.program_id(2)

    @pl.when(k == 0)
    def _init():
        acc_ref[...] = jnp.zeros_like(acc_ref)

    # Two MXU contractions share one f32 accumulator (no t1/t2 temporaries,
    # no extra VPU add on the critical path).
    acc_ref[...] += jnp.dot(a_ref[...], b_ref[...],
                            preferred_element_type=jnp.float32)
    acc_ref[...] += jnp.dot(c_ref[...], d_ref[...],
                            preferred_element_type=jnp.float32)

    @pl.when(k == pl.num_programs(2) - 1)
    def _finalize():
        o_ref[...] = acc_ref[...].astype(o_ref.dtype)


def _round_up(x, m):
    return ((x + m - 1) // m) * m


def _pick_tile(dim, pref):
    # Lane/sublane aligned tile, no larger than `pref`, no larger than needed.
    return min(pref, _round_up(dim, 128))


@functools.partial(jax.jit, static_argnames=("tm", "tn", "tk"))
def mm_plus_mm(a, b, c, d, *, tm=256, tn=256, tk=512):
    M, K = a.shape
    K2, N = b.shape
    assert K == K2 and c.shape == (M, K) and d.shape == (K, N)
    out_dtype = a.dtype

    # Clamp tiles for small problems, then pad operands to tile-divisible,
    # (8,128)-aligned shapes. Zero padding along K is mathematically inert.
    tm = _pick_tile(M, tm)
    tn = _pick_tile(N, tn)
    tk = _pick_tile(K, tk)
    Mp, Np, Kp = _round_up(M, tm), _round_up(N, tn), _round_up(K, tk)

    a_p = jnp.pad(a, ((0, Mp - M), (0, Kp - K)))
    b_p = jnp.pad(b, ((0, Kp - K), (0, Np - N)))
    c_p = jnp.pad(c, ((0, Mp - M), (0, Kp - K)))
    d_p = jnp.pad(d, ((0, Kp - K), (0, Np - N)))

    grid = (Mp // tm, Np // tn, Kp // tk)

    lhs_spec = pl.BlockSpec((tm, tk), lambda i, j, k: (i, k))
    rhs_spec = pl.BlockSpec((tk, tn), lambda i, j, k: (k, j))
    out_spec = pl.BlockSpec((tm, tn), lambda i, j, k: (i, j))

    # Explicit scoped-VMEM budget: double-buffered inputs + output + f32 acc,
    # plus headroom; capped well below v7x's 64 MiB physical VMEM.
    itemsize = jnp.dtype(out_dtype).itemsize
    footprint = (2 * 2 * (tm * tk + tk * tn) * itemsize     # 4 inputs, 2 bufs
                 + 2 * tm * tn * itemsize                    # output, 2 bufs
                 + tm * tn * 4)                              # f32 accumulator
    vmem_limit = min(48 * 1024 * 1024, max(16 * 1024 * 1024, 2 * footprint))

    cost = pl.CostEstimate(
        flops=4 * Mp * Np * Kp,            # two M*N*K matmuls @ 2 flops/MAC
        transcendentals=0,
        bytes_accessed=(2 * Mp * Kp + 2 * Kp * Np + Mp * Np) * itemsize,
    )

    out_padded = pl.pallas_call(
        _mm_plus_mm_kernel,
        out_shape=jax.ShapeDtypeStruct((Mp, Np), out_dtype),
        grid_spec=pltpu.PrefetchScalarGridSpec(
            num_scalar_prefetch=0,
            grid=grid,
            in_specs=[lhs_spec, rhs_spec, lhs_spec, rhs_spec],
            out_specs=out_spec,
            scratch_shapes=[pltpu.VMEM((tm, tn), jnp.float32)],
        ),
        compiler_params=pltpu.CompilerParams(
            dimension_semantics=("parallel", "parallel", "arbitrary"),
            vmem_limit_bytes=vmem_limit,
        ),
        cost_estimate=cost,
    )(a_p, b_p, c_p, d_p)

    return out_padded[:M, :N]


if __name__ == "__main__":
    key = jax.random.PRNGKey(0)

    # --- Faithful test: 3x3 matrices, exactly like the PyTorch module spec. ---
    k1, k2, k3, k4 = jax.random.split(key, 4)
    input1 = jax.random.normal(k1, (3, 3), dtype=jnp.float32)
    input2 = jax.random.normal(k2, (3, 3), dtype=jnp.float32)
    input3 = jax.random.normal(k3, (3, 3), dtype=jnp.float32)
    input4 = jax.random.normal(k4, (3, 3), dtype=jnp.float32)

    out_small = jax.block_until_ready(mm_plus_mm(input1, input2, input3, input4))
    ref_small = input1 @ input2 + input3 @ input4
    assert out_small.shape == (3, 3)
    assert jnp.allclose(out_small, ref_small, atol=1e-4, rtol=1e-4), \
        "3x3 mismatch vs reference"

    # --- Tiled-path test: exercises the (i, j, k) grid and k-accumulation. ---
    k5, k6, k7, k8 = jax.random.split(jax.random.PRNGKey(1), 4)
    M, K, N = 512, 1024, 512   # grid = (2, 2, 2) with tm=tn=256, tk=512
    A = jax.random.normal(k5, (M, K), dtype=jnp.float32)
    B = jax.random.normal(k6, (K, N), dtype=jnp.float32)
    C = jax.random.normal(k7, (M, K), dtype=jnp.float32)
    D = jax.random.normal(k8, (K, N), dtype=jnp.float32)

    out_big = jax.block_until_ready(mm_plus_mm(A, B, C, D))
    ref_big = A @ B + C @ D
    assert jnp.allclose(out_big, ref_big, atol=2e-2, rtol=2e-3), \
        "tiled mismatch vs reference"

    print("KERNEL_OK")
</pallas_src>

<mosaic_0001>
module attributes {stable_mosaic.version = 11 : i64} {
  func.func @_mm_plus_mm_kernel(%arg0: i32, %arg1: i32, %arg2: i32, %arg3: memref<128x128xf32, #tpu.memory_space<vmem>>, %arg4: memref<128x128xf32, #tpu.memory_space<vmem>>, %arg5: memref<128x128xf32, #tpu.memory_space<vmem>>, %arg6: memref<128x128xf32, #tpu.memory_space<vmem>>, %arg7: memref<128x128xf32, #tpu.memory_space<vmem>>, %arg8: memref<128x128xf32, #tpu.memory_space<vmem>>) attributes {dimension_semantics = [#tpu.dimension_semantics<parallel>, #tpu.dimension_semantics<parallel>, #tpu.dimension_semantics<arbitrary>], iteration_bounds = array<i64: 1, 1, 1>, scalar_prefetch = 0 : i64, scratch_operands = 1 : i64, tpu.core_type = #tpu.core_type<tc>, window_params = [{transform_indices = @transform_0, window_bounds = array<i64: 128, 128>}, {transform_indices = @transform_1, window_bounds = array<i64: 128, 128>}, {transform_indices = @transform_2, window_bounds = array<i64: 128, 128>}, {transform_indices = @transform_3, window_bounds = array<i64: 128, 128>}, {transform_indices = @transform_4, window_bounds = array<i64: 128, 128>}]} {
    %c0_i32 = arith.constant 0 : i32
    %0 = arith.cmpi eq, %arg2, %c0_i32 : i32
    %1 = arith.extui %0 : i1 to i32
    %c0_i32_0 = arith.constant 0 : i32
    %2 = arith.cmpi ne, %1, %c0_i32_0 : i32
    scf.if %2 {
      %cst_19 = arith.constant 0.000000e+00 : f32
      %18 = vector.broadcast %cst_19 : f32 to vector<128x128xf32>
      %c0_20 = arith.constant 0 : index
      %c0_21 = arith.constant 0 : index
      %19 = vector.load %arg8[%c0_20, %c0_21] : memref<128x128xf32, #tpu.memory_space<vmem>>, vector<128x128xf32>
      tpu.vector_store %arg8[%c0_20, %c0_21], %18 {strides = array<i32>} : memref<128x128xf32, #tpu.memory_space<vmem>>, vector<128x128xf32>,
    } else {
    }
    %c0 = arith.constant 0 : index
    %c0_1 = arith.constant 0 : index
    %3 = vector.load %arg8[%c0, %c0_1] : memref<128x128xf32, #tpu.memory_space<vmem>>, vector<128x128xf32>
    %c0_2 = arith.constant 0 : index
    %c0_3 = arith.constant 0 : index
    %4 = vector.load %arg3[%c0_2, %c0_3] : memref<128x128xf32, #tpu.memory_space<vmem>>, vector<128x128xf32>
    %c0_4 = arith.constant 0 : index
    %c0_5 = arith.constant 0 : index
    %5 = vector.load %arg4[%c0_4, %c0_5] : memref<128x128xf32, #tpu.memory_space<vmem>>, vector<128x128xf32>
    %cst = arith.constant dense<0.000000e+00> : vector<128x128xf32>
    %6 = tpu.matmul %4, %5, %cst {dimension_numbers = #tpu.dot_dimension_numbers<[1], [0], [0], [1], [0, 0, 1, 1], [], []>} : vector<128x128xf32>, vector<128x128xf32>, vector<128x128xf32> -> vector<128x128xf32>
    %7 = arith.addf %3, %6 : vector<128x128xf32>
    %c0_6 = arith.constant 0 : index
    %c0_7 = arith.constant 0 : index
    %8 = vector.load %arg8[%c0_6, %c0_7] : memref<128x128xf32, #tpu.memory_space<vmem>>, vector<128x128xf32>
    tpu.vector_store %arg8[%c0_6, %c0_7], %7 {strides = array<i32>} : memref<128x128xf32, #tpu.memory_space<vmem>>, vector<128x128xf32>,
    %c0_8 = arith.constant 0 : index
    %c0_9 = arith.constant 0 : index
    %9 = vector.load %arg8[%c0_8, %c0_9] : memref<128x128xf32, #tpu.memory_space<vmem>>, vector<128x128xf32>
    %c0_10 = arith.constant 0 : index
    %c0_11 = arith.constant 0 : index
    %10 = vector.load %arg5[%c0_10, %c0_11] : memref<128x128xf32, #tpu.memory_space<vmem>>, vector<128x128xf32>
    %c0_12 = arith.constant 0 : index
    %c0_13 = arith.constant 0 : index
    %11 = vector.load %arg6[%c0_12, %c0_13] : memref<128x128xf32, #tpu.memory_space<vmem>>, vector<128x128xf32>
    %cst_14 = arith.constant dense<0.000000e+00> : vector<128x128xf32>
    %12 = tpu.matmul %10, %11, %cst_14 {dimension_numbers = #tpu.dot_dimension_numbers<[1], [0], [0], [1], [0, 0, 1, 1], [], []>} : vector<128x128xf32>, vector<128x128xf32>, vector<128x128xf32> -> vector<128x128xf32>
    %13 = arith.addf %9, %12 : vector<128x128xf32>
    %c0_15 = arith.constant 0 : index
    %c0_16 = arith.constant 0 : index
    %14 = vector.load %arg8[%c0_15, %c0_16] : memref<128x128xf32, #tpu.memory_space<vmem>>, vector<128x128xf32>
    tpu.vector_store %arg8[%c0_15, %c0_16], %13 {strides = array<i32>} : memref<128x128xf32, #tpu.memory_space<vmem>>, vector<128x128xf32>,
    %c0_i32_17 = arith.constant 0 : i32
    %15 = arith.cmpi eq, %arg2, %c0_i32_17 : i32
    %16 = arith.extui %15 : i1 to i32
    %c0_i32_18 = arith.constant 0 : i32
    %17 = arith.cmpi ne, %16, %c0_i32_18 : i32
    scf.if %17 {
      %c0_19 = arith.constant 0 : index
      %c0_20 = arith.constant 0 : index
      %18 = vector.load %arg8[%c0_19, %c0_20] : memref<128x128xf32, #tpu.memory_space<vmem>>, vector<128x128xf32>
      %c0_21 = arith.constant 0 : index
      %c0_22 = arith.constant 0 : index
      %19 = vector.load %arg7[%c0_21, %c0_22] : memref<128x128xf32, #tpu.memory_space<vmem>>, vector<128x128xf32>
      tpu.vector_store %arg7[%c0_21, %c0_22], %18 {strides = array<i32>} : memref<128x128xf32, #tpu.memory_space<vmem>>, vector<128x128xf32>,
    } else {
    }
    return
  }
  func.func @transform_0(%arg0: i32, %arg1: i32, %arg2: i32) -> (i32, i32) {
    %c0_i32 = arith.constant 0 : i32
    return %arg0, %arg2 : i32, i32
  }
  func.func @transform_1(%arg0: i32, %arg1: i32, %arg2: i32) -> (i32, i32) {
    %c0_i32 = arith.constant 0 : i32
    return %arg2, %arg1 : i32, i32
  }
  func.func @transform_2(%arg0: i32, %arg1: i32, %arg2: i32) -> (i32, i32) {
    %c0_i32 = arith.constant 0 : i32
    return %arg0, %arg2 : i32, i32
  }
  func.func @transform_3(%arg0: i32, %arg1: i32, %arg2: i32) -> (i32, i32) {
    %c0_i32 = arith.constant 0 : i32
    return %arg2, %arg1 : i32, i32
  }
  func.func @transform_4(%arg0: i32, %arg1: i32, %arg2: i32) -> (i32, i32) {
    %c0_i32 = arith.constant 0 : i32
    return %arg0, %arg1 : i32, i32
  }
}

</mosaic_0001>

<llo_original>
// kernel: mm_plus_mm.1
$region0: #{mm_plus_mm.1}
  #allocation0 [shape = 'u32[]', space=smem, size = 0x4, offset = 0x4, fixed_abs, tag = 'smem constant byte address 0x4 - core index']
  #allocation1 [shape = 'u32[144,128]{1,0:T(1,128)}', space=vmem, size = 0x12000, scoped, tag = 'internal scratch']
  #allocation2 [shape = 'f32[128,128]{1,0:T(8,128)}', space=vmem, size = 0x10000, scoped, tag = 'scratch operand']
  %s0 = inlined_call_operand.vmem [shape: f32[128,128], index: 0, kind: input, shape index: {}]
  %s1 = inlined_call_operand.vmem [shape: f32[128,128], index: 1, kind: input, shape index: {}]
  %s2 = inlined_call_operand.vmem [shape: f32[128,128], index: 2, kind: input, shape index: {}]
  %s3 = inlined_call_operand.vmem [shape: f32[128,128], index: 3, kind: input, shape index: {}]
  %s4 = inlined_call_operand.vmem [shape: f32[128,128], index: 4, kind: output, shape index: {}]
  %s5 = sld [smem:[#allocation0]]
  $region34: #{mm_plus_mm.1} parent=0
    _
  %s7 = ssub.s32 1, %s5
  %s8 = scalar_select 0, %s7, %s5
  // Predicated region
  $region2: #{mm_plus_mm.1} parent=0 // pred_check
    _
  $region3: #{mm_plus_mm.1} parent=0 // pred_check_branch
    %10 = sbr.rel (0) target = $region5
  $region4: #{mm_plus_mm.1} parent=0 // pred_region
    _
  $region5: #{mm_plus_mm.1} parent=0 // pred_fallthru
    _
  // Predicated region
  $region6: #{mm_plus_mm.1} parent=0 // pred_check
    _
  $region7: #{mm_plus_mm.1} parent=0 // pred_check_branch
    %12 = sbr.rel (0) target = $region9
  $region8: #{mm_plus_mm.1} parent=0 // pred_region
    _
  $region9: #{mm_plus_mm.1} parent=0 // pred_fallthru
    _
  // Predicated region
  $region10: #{mm_plus_mm.1} parent=0 // pred_check
    _
  $region11: #{mm_plus_mm.1} parent=0 // pred_check_branch
    %14 = sbr.rel (0) target = $region13
  $region12: #{mm_plus_mm.1} parent=0 // pred_region
    _
  $region13: #{mm_plus_mm.1} parent=0 // pred_fallthru
    _
  // Predicated region
  $region14: #{mm_plus_mm.1} parent=0 // pred_check
    _
  $region15: #{mm_plus_mm.1} parent=0 // pred_check_branch
    %16 = sbr.rel (0) target = $region17
  $region16: #{mm_plus_mm.1} parent=0 // pred_region
    _
  $region17: #{mm_plus_mm.1} parent=0 // pred_fallthru
    _
  %p17 = scmp.eq.s32.totalorder 0, 0
  // Predicated region
  $region18: #{mm_plus_mm.1} parent=0 // pred_check
    %p18 = pneg %p17
  $region19: #{mm_plus_mm.1} parent=0 // pred_check_branch
    %20 = sbr.rel (%p18) target = $region21
  $region20: #{mm_plus_mm.1} parent=0 // pred_region
    %21 = vst [vmem:[#allocation2] sm:$0xff] 0.0
    %22 = vst [vmem:[#allocation2 + $0x8] sm:$0xff] 0.0
    %23 = vst [vmem:[#allocation2 + $0x10] sm:$0xff] 0.0
    %24 = vst [vmem:[#allocation2 + $0x18] sm:$0xff] 0.0
    %25 = vst [vmem:[#allocation2 + $0x20] sm:$0xff] 0.0
    %26 = vst [vmem:[#allocation2 + $0x28] sm:$0xff] 0.0
    %27 = vst [vmem:[#allocation2 + $0x30] sm:$0xff] 0.0
    %28 = vst [vmem:[#allocation2 + $0x38] sm:$0xff] 0.0
    %29 = vst [vmem:[#allocation2 + $0x40] sm:$0xff] 0.0
    %30 = vst [vmem:[#allocation2 + $0x48] sm:$0xff] 0.0
    %31 = vst [vmem:[#allocation2 + $0x50] sm:$0xff] 0.0
    %32 = vst [vmem:[#allocation2 + $0x58] sm:$0xff] 0.0
    %33 = vst [vmem:[#allocation2 + $0x60] sm:$0xff] 0.0
    %34 = vst [vmem:[#allocation2 + $0x68] sm:$0xff] 0.0
    %35 = vst [vmem:[#allocation2 + $0x70] sm:$0xff] 0.0
    %36 = vst [vmem:[#allocation2 + $0x78] sm:$0xff] 0.0
  $region21: #{mm_plus_mm.1} parent=0 // pred_fallthru
    _
  %v37 = vld [vmem:[#allocation2] sm:$0xff]
  %v38 = vld [vmem:[#allocation2 + $0x8] sm:$0xff]
  %v39 = vld [vmem:[#allocation2 + $0x10] sm:$0xff]
  %v40 = vld [vmem:[#allocation2 + $0x18] sm:$0xff]
  %v41 = vld [vmem:[#allocation2 + $0x20] sm:$0xff]
  %v42 = vld [vmem:[#allocation2 + $0x28] sm:$0xff]
  %v43 = vld [vmem:[#allocation2 + $0x30] sm:$0xff]
  %v44 = vld [vmem:[#allocation2 + $0x38] sm:$0xff]
  %v45 = vld [vmem:[#allocation2 + $0x40] sm:$0xff]
  %v46 = vld [vmem:[#allocation2 + $0x48] sm:$0xff]
  %v47 = vld [vmem:[#allocation2 + $0x50] sm:$0xff]
  %v48 = vld [vmem:[#allocation2 + $0x58] sm:$0xff]
  %v49 = vld [vmem:[#allocation2 + $0x60] sm:$0xff]
  %v50 = vld [vmem:[#allocation2 + $0x68] sm:$0xff]
  %v51 = vld [vmem:[#allocation2 + $0x70] sm:$0xff]
  %v52 = vld [vmem:[#allocation2 + $0x78] sm:$0xff]
  %v53 = vld [vmem:[%s0] sm:$0xff]
  %v54 = vld [vmem:[%s0 + $0x8] sm:$0xff]
  %v55 = vld [vmem:[%s0 + $0x10] sm:$0xff]
  %v56 = vld [vmem:[%s0 + $0x18] sm:$0xff]
  %v57 = vld [vmem:[%s0 + $0x20] sm:$0xff]
  %v58 = vld [vmem:[%s0 + $0x28] sm:$0xff]
  %v59 = vld [vmem:[%s0 + $0x30] sm:$0xff]
  %v60 = vld [vmem:[%s0 + $0x38] sm:$0xff]
  %v61 = vld [vmem:[%s0 + $0x40] sm:$0xff]
  %v62 = vld [vmem:[%s0 + $0x48] sm:$0xff]
  %v63 = vld [vmem:[%s0 + $0x50] sm:$0xff]
  %v64 = vld [vmem:[%s0 + $0x58] sm:$0xff]
  %v65 = vld [vmem:[%s0 + $0x60] sm:$0xff]
  %v66 = vld [vmem:[%s0 + $0x68] sm:$0xff]
  %v67 = vld [vmem:[%s0 + $0x70] sm:$0xff]
  %v68 = vld [vmem:[%s0 + $0x78] sm:$0xff]
  %v69 = vld [vmem:[%s1] sm:$0xff]
  %v70 = vld [vmem:[%s1 + $0x8] sm:$0xff]
  %v71 = vld [vmem:[%s1 + $0x10] sm:$0xff]
  %v72 = vld [vmem:[%s1 + $0x18] sm:$0xff]
  %v73 = vld [vmem:[%s1 + $0x20] sm:$0xff]
  %v74 = vld [vmem:[%s1 + $0x28] sm:$0xff]
  %v75 = vld [vmem:[%s1 + $0x30] sm:$0xff]
  %v76 = vld [vmem:[%s1 + $0x38] sm:$0xff]
  %v77 = vld [vmem:[%s1 + $0x40] sm:$0xff]
  %v78 = vld [vmem:[%s1 + $0x48] sm:$0xff]
  %v79 = vld [vmem:[%s1 + $0x50] sm:$0xff]
  %v80 = vld [vmem:[%s1 + $0x58] sm:$0xff]
  %v81 = vld [vmem:[%s1 + $0x60] sm:$0xff]
  %v82 = vld [vmem:[%s1 + $0x68] sm:$0xff]
  %v83 = vld [vmem:[%s1 + $0x70] sm:$0xff]
  %v84 = vld [vmem:[%s1 + $0x78] sm:$0xff]
  %85 = vmatprep.subr.mxu0 0.0
  %86 = vmatpush1.msra.mxu0 %v84
  %87 = vmatprep.subr.mxu0 0.0
  %88 = vmatpush1.msra.mxu0 %v83
  %89 = vmatprep.subr.mxu0 0.0
  %90 = vmatpush1.msra.mxu0 %v82
  %91 = vmatprep.subr.mxu0 0.0
  %92 = vmatpush1.msra.mxu0 %v81
  %93 = vmatprep.subr.mxu0 0.0
  %94 = vmatpush1.msra.mxu0 %v80
  %95 = vmatprep.subr.mxu0 0.0
  %96 = vmatpush1.msra.mxu0 %v79
  %97 = vmatprep.subr.mxu0 0.0
  %98 = vmatpush1.msra.mxu0 %v78
  %99 = vmatprep.subr.mxu0 0.0
  %100 = vmatpush1.msra.mxu0 %v77
  %101 = vmatprep.subr.mxu0 0.0
  %102 = vmatpush1.msra.mxu0 %v76
  %103 = vmatprep.subr.mxu0 0.0
  %104 = vmatpush1.msra.mxu0 %v75
  %105 = vmatprep.subr.mxu0 0.0
  %106 = vmatpush1.msra.mxu0 %v74
  %107 = vmatprep.subr.mxu0 0.0
  %108 = vmatpush1.msra.mxu0 %v73
  %109 = vmatprep.subr.mxu0 0.0
  %110 = vmatpush1.msra.mxu0 %v72
  %111 = vmatprep.subr.mxu0 0.0
  %112 = vmatpush1.msra.mxu0 %v71
  %113 = vmatprep.subr.mxu0 0.0
  %114 = vmatpush1.msra.mxu0 %v70
  %115 = vmatprep.subr.mxu0 0.0
  %116 = vmatpush1.msra.mxu0 %v69
  %117 = vmatprep.subr.mxu0 0.0
  %118 = vmatpush2.msra.mxu0 0.0
  %119 = vmatprep.subr.mxu0 0.0
  %120 = vmatpush2.msra.mxu0 0.0
  %121 = vmatprep.subr.mxu0 0.0
  %122 = vmatpush2.msra.mxu0 0.0
  %123 = vmatprep.subr.mxu0 0.0
  %124 = vmatpush2.msra.mxu0 0.0
  %125 = vmatprep.subr.mxu0 0.0
  %126 = vmatpush2.msra.mxu0 0.0
  %127 = vmatprep.subr.mxu0 0.0
  %128 = vmatpush2.msra.mxu0 0.0
  %129 = vmatprep.subr.mxu0 0.0
  %130 = vmatpush2.msra.mxu0 0.0
  %131 = vmatprep.subr.mxu0 0.0
  %132 = vmatpush2.msra.mxu0 0.0
  %133 = vmatprep.subr.mxu0 0.0
  %134 = vmatpush2.msra.mxu0 0.0
  %135 = vmatprep.subr.mxu0 0.0
  %136 = vmatpush2.msra.mxu0 0.0
  %137 = vmatprep.subr.mxu0 0.0
  %138 = vmatpush2.msra.mxu0 0.0
  %139 = vmatprep.subr.mxu0 0.0
  %140 = vmatpush2.msra.mxu0 0.0
  %141 = vmatprep.subr.mxu0 0.0
  %142 = vmatpush2.msra.mxu0 0.0
  %143 = vmatprep.subr.mxu0 0.0
  %144 = vmatpush2.msra.mxu0 0.0
  %145 = vmatprep.subr.mxu0 0.0
  %146 = vmatpush2.msra.mxu0 0.0
  %147 = vmatprep.subr.mxu0 0.0
  %148 = vmatpush2.msra.mxu0 0.0
  %149 = vmatprep.mubr.f32.mxu0 0.0
  %150 = vmatmul.mubr.f32.gmra.mxu0 %v53
  %v151 = vpop.f32.mrf.mxu0
  %v152 = vadd.f32 0.0, %v151
  %v153 = vpop.f32.mrf.mxu0
  %154 = vmatprep.mubr.f32.mxu0 0.0
  %155 = vmatmul.mubr.f32.gmra.mxu0 %v54
  %v156 = vpop.f32.mrf.mxu0
  %v157 = vadd.f32 0.0, %v156
  %v158 = vpop.f32.mrf.mxu0
  %159 = vmatprep.mubr.f32.mxu0 0.0
  %160 = vmatmul.mubr.f32.gmra.mxu0 %v55
  %v161 = vpop.f32.mrf.mxu0
  %v162 = vadd.f32 0.0, %v161
  %v163 = vpop.f32.mrf.mxu0
  %164 = vmatprep.mubr.f32.mxu0 0.0
  %165 = vmatmul.mubr.f32.gmra.mxu0 %v56
  %v166 = vpop.f32.mrf.mxu0
  %v167 = vadd.f32 0.0, %v166
  %v168 = vpop.f32.mrf.mxu0
  %169 = vmatprep.mubr.f32.mxu0 0.0
  %170 = vmatmul.mubr.f32.gmra.mxu0 %v57
  %v171 = vpop.f32.mrf.mxu0
  %v172 = vadd.f32 0.0, %v171
  %v173 = vpop.f32.mrf.mxu0
  %174 = vmatprep.mubr.f32.mxu0 0.0
  %175 = vmatmul.mubr.f32.gmra.mxu0 %v58
  %v176 = vpop.f32.mrf.mxu0
  %v177 = vadd.f32 0.0, %v176
  %v178 = vpop.f32.mrf.mxu0
  %179 = vmatprep.mubr.f32.mxu0 0.0
  %180 = vmatmul.mubr.f32.gmra.mxu0 %v59
  %v181 = vpop.f32.mrf.mxu0
  %v182 = vadd.f32 0.0, %v181
  %v183 = vpop.f32.mrf.mxu0
  %184 = vmatprep.mubr.f32.mxu0 0.0
  %185 = vmatmul.mubr.f32.gmra.mxu0 %v60
  %v186 = vpop.f32.mrf.mxu0
  %v187 = vadd.f32 0.0, %v186
  %v188 = vpop.f32.mrf.mxu0
  %189 = vmatprep.mubr.f32.mxu0 0.0
  %190 = vmatmul.mubr.f32.gmra.mxu0 %v61
  %v191 = vpop.f32.mrf.mxu0
  %v192 = vadd.f32 0.0, %v191
  %v193 = vpop.f32.mrf.mxu0
  %194 = vmatprep.mubr.f32.mxu0 0.0
  %195 = vmatmul.mubr.f32.gmra.mxu0 %v62
  %v196 = vpop.f32.mrf.mxu0
  %v197 = vadd.f32 0.0, %v196
  %v198 = vpop.f32.mrf.mxu0
  %199 = vmatprep.mubr.f32.mxu0 0.0
  %200 = vmatmul.mubr.f32.gmra.mxu0 %v63
  %v201 = vpop.f32.mrf.mxu0
  %v202 = vadd.f32 0.0, %v201
  %v203 = vpop.f32.mrf.mxu0
  %204 = vmatprep.mubr.f32.mxu0 0.0
  %205 = vmatmul.mubr.f32.gmra.mxu0 %v64
  %v206 = vpop.f32.mrf.mxu0
  %v207 = vadd.f32 0.0, %v206
  %v208 = vpop.f32.mrf.mxu0
  %209 = vmatprep.mubr.f32.mxu0 0.0
  %210 = vmatmul.mubr.f32.gmra.mxu0 %v65
  %v211 = vpop.f32.mrf.mxu0
  %v212 = vadd.f32 0.0, %v211
  %v213 = vpop.f32.mrf.mxu0
  %214 = vmatprep.mubr.f32.mxu0 0.0
  %215 = vmatmul.mubr.f32.gmra.mxu0 %v66
  %v216 = vpop.f32.mrf.mxu0
  %v217 = vadd.f32 0.0, %v216
  %v218 = vpop.f32.mrf.mxu0
  %219 = vmatprep.mubr.f32.mxu0 0.0
  %220 = vmatmul.mubr.f32.gmra.mxu0 %v67
  %v221 = vpop.f32.mrf.mxu0
  %v222 = vadd.f32 0.0, %v221
  %v223 = vpop.f32.mrf.mxu0
  %224 = vmatprep.mubr.f32.mxu0 0.0
  %225 = vmatmul.mubr.f32.gmra.mxu0 %v68
  %v226 = vpop.f32.mrf.mxu0
  %v227 = vadd.f32 0.0, %v226
  %v228 = vpop.f32.mrf.mxu0
  %229 = vdwg.mxu0
  %v230 = vadd.f32 %v37, %v152
  %v231 = vadd.f32 %v38, %v157
  %v232 = vadd.f32 %v39, %v162
  %v233 = vadd.f32 %v40, %v167
  %v234 = vadd.f32 %v41, %v172
  %v235 = vadd.f32 %v42, %v177
  %v236 = vadd.f32 %v43, %v182
  %v237 = vadd.f32 %v44, %v187
  %v238 = vadd.f32 %v45, %v192
  %v239 = vadd.f32 %v46, %v197
  %v240 = vadd.f32 %v47, %v202
  %v241 = vadd.f32 %v48, %v207
  %v242 = vadd.f32 %v49, %v212
  %v243 = vadd.f32 %v50, %v217
  %v244 = vadd.f32 %v51, %v222
  %v245 = vadd.f32 %v52, %v227
  %246 = vst [vmem:[#allocation2] sm:$0xff] %v230
  %247 = vst [vmem:[#allocation2 + $0x8] sm:$0xff] %v231
  %248 = vst [vmem:[#allocation2 + $0x10] sm:$0xff] %v232
  %249 = vst [vmem:[#allocation2 + $0x18] sm:$0xff] %v233
  %250 = vst [vmem:[#allocation2 + $0x20] sm:$0xff] %v234
  %251 = vst [vmem:[#allocation2 + $0x28] sm:$0xff] %v235
  %252 = vst [vmem:[#allocation2 + $0x30] sm:$0xff] %v236
  %253 = vst [vmem:[#allocation2 + $0x38] sm:$0xff] %v237
  %254 = vst [vmem:[#allocation2 + $0x40] sm:$0xff] %v238
  %255 = vst [vmem:[#allocation2 + $0x48] sm:$0xff] %v239
  %256 = vst [vmem:[#allocation2 + $0x50] sm:$0xff] %v240
  %257 = vst [vmem:[#allocation2 + $0x58] sm:$0xff] %v241
  %258 = vst [vmem:[#allocation2 + $0x60] sm:$0xff] %v242
  %259 = vst [vmem:[#allocation2 + $0x68] sm:$0xff] %v243
  %260 = vst [vmem:[#allocation2 + $0x70] sm:$0xff] %v244
  %261 = vst [vmem:[#allocation2 + $0x78] sm:$0xff] %v245
  %v262 = vld [vmem:[#allocation2] sm:$0xff]
  %v263 = vld [vmem:[#allocation2 + $0x8] sm:$0xff]
  %v264 = vld [vmem:[#allocation2 + $0x10] sm:$0xff]
  %v265 = vld [vmem:[#allocation2 + $0x18] sm:$0xff]
  %v266 = vld [vmem:[#allocation2 + $0x20] sm:$0xff]
  %v267 = vld [vmem:[#allocation2 + $0x28] sm:$0xff]
  %v268 = vld [vmem:[#allocation2 + $0x30] sm:$0xff]
  %v269 = vld [vmem:[#allocation2 + $0x38] sm:$0xff]
  %v270 = vld [vmem:[#allocation2 + $0x40] sm:$0xff]
  %v271 = vld [vmem:[#allocation2 + $0x48] sm:$0xff]
  %v272 = vld [vmem:[#allocation2 + $0x50] sm:$0xff]
  %v273 = vld [vmem:[#allocation2 + $0x58] sm:$0xff]
  %v274 = vld [vmem:[#allocation2 + $0x60] sm:$0xff]
  %v275 = vld [vmem:[#allocation2 + $0x68] sm:$0xff]
  %v276 = vld [vmem:[#allocation2 + $0x70] sm:$0xff]
  %v277 = vld [vmem:[#allocation2 + $0x78] sm:$0xff]
  %v278 = vld [vmem:[%s2] sm:$0xff]
  %v279 = vld [vmem:[%s2 + $0x8] sm:$0xff]
  %v280 = vld [vmem:[%s2 + $0x10] sm:$0xff]
  %v281 = vld [vmem:[%s2 + $0x18] sm:$0xff]
  %v282 = vld [vmem:[%s2 + $0x20] sm:$0xff]
  %v283 = vld [vmem:[%s2 + $0x28] sm:$0xff]
  %v284 = vld [vmem:[%s2 + $0x30] sm:$0xff]
  %v285 = vld [vmem:[%s2 + $0x38] sm:$0xff]
  %v286 = vld [vmem:[%s2 + $0x40] sm:$0xff]
  %v287 = vld [vmem:[%s2 + $0x48] sm:$0xff]
  %v288 = vld [vmem:[%s2 + $0x50] sm:$0xff]
  %v289 = vld [vmem:[%s2 + $0x58] sm:$0xff]
  %v290 = vld [vmem:[%s2 + $0x60] sm:$0xff]
  %v291 = vld [vmem:[%s2 + $0x68] sm:$0xff]
  %v292 = vld [vmem:[%s2 + $0x70] sm:$0xff]
  %v293 = vld [vmem:[%s2 + $0x78] sm:$0xff]
  %v294 = vld [vmem:[%s3] sm:$0xff]
  %v295 = vld [vmem:[%s3 + $0x8] sm:$0xff]
  %v296 = vld [vmem:[%s3 + $0x10] sm:$0xff]
  %v297 = vld [vmem:[%s3 + $0x18] sm:$0xff]
  %v298 = vld [vmem:[%s3 + $0x20] sm:$0xff]
  %v299 = vld [vmem:[%s3 + $0x28] sm:$0xff]
  %v300 = vld [vmem:[%s3 + $0x30] sm:$0xff]
  %v301 = vld [vmem:[%s3 + $0x38] sm:$0xff]
  %v302 = vld [vmem:[%s3 + $0x40] sm:$0xff]
  %v303 = vld [vmem:[%s3 + $0x48] sm:$0xff]
  %v304 = vld [vmem:[%s3 + $0x50] sm:$0xff]
  %v305 = vld [vmem:[%s3 + $0x58] sm:$0xff]
  %v306 = vld [vmem:[%s3 + $0x60] sm:$0xff]
  %v307 = vld [vmem:[%s3 + $0x68] sm:$0xff]
  %v308 = vld [vmem:[%s3 + $0x70] sm:$0xff]
  %v309 = vld [vmem:[%s3 + $0x78] sm:$0xff]
  %310 = vmatprep.subr.mxu0 0.0
  %311 = vmatpush1.msra.mxu0 %v309
  %312 = vmatprep.subr.mxu0 0.0
  %313 = vmatpush1.msra.mxu0 %v308
  %314 = vmatprep.subr.mxu0 0.0
  %315 = vmatpush1.msra.mxu0 %v307
  %316 = vmatprep.subr.mxu0 0.0
  %317 = vmatpush1.msra.mxu0 %v306
  %318 = vmatprep.subr.mxu0 0.0
  %319 = vmatpush1.msra.mxu0 %v305
  %320 = vmatprep.subr.mxu0 0.0
  %321 = vmatpush1.msra.mxu0 %v304
  %322 = vmatprep.subr.mxu0 0.0
  %323 = vmatpush1.msra.mxu0 %v303
  %324 = vmatprep.subr.mxu0 0.0
  %325 = vmatpush1.msra.mxu0 %v302
  %326 = vmatprep.subr.mxu0 0.0
  %327 = vmatpush1.msra.mxu0 %v301
  %328 = vmatprep.subr.mxu0 0.0
  %329 = vmatpush1.msra.mxu0 %v300
  %330 = vmatprep.subr.mxu0 0.0
  %331 = vmatpush1.msra.mxu0 %v299
  %332 = vmatprep.subr.mxu0 0.0
  %333 = vmatpush1.msra.mxu0 %v298
  %334 = vmatprep.subr.mxu0 0.0
  %335 = vmatpush1.msra.mxu0 %v297
  %336 = vmatprep.subr.mxu0 0.0
  %337 = vmatpush1.msra.mxu0 %v296
  %338 = vmatprep.subr.mxu0 0.0
  %339 = vmatpush1.msra.mxu0 %v295
  %340 = vmatprep.subr.mxu0 0.0
  %341 = vmatpush1.msra.mxu0 %v294
  %342 = vmatprep.subr.mxu0 0.0
  %343 = vmatpush2.msra.mxu0 0.0
  %344 = vmatprep.subr.mxu0 0.0
  %345 = vmatpush2.msra.mxu0 0.0
  %346 = vmatprep.subr.mxu0 0.0
  %347 = vmatpush2.msra.mxu0 0.0
  %348 = vmatprep.subr.mxu0 0.0
  %349 = vmatpush2.msra.mxu0 0.0
  %350 = vmatprep.subr.mxu0 0.0
  %351 = vmatpush2.msra.mxu0 0.0
  %352 = vmatprep.subr.mxu0 0.0
  %353 = vmatpush2.msra.mxu0 0.0
  %354 = vmatprep.subr.mxu0 0.0
  %355 = vmatpush2.msra.mxu0 0.0
  %356 = vmatprep.subr.mxu0 0.0
  %357 = vmatpush2.msra.mxu0 0.0
  %358 = vmatprep.subr.mxu0 0.0
  %359 = vmatpush2.msra.mxu0 0.0
  %360 = vmatprep.subr.mxu0 0.0
  %361 = vmatpush2.msra.mxu0 0.0
  %362 = vmatprep.subr.mxu0 0.0
  %363 = vmatpush2.msra.mxu0 0.0
  %364 = vmatprep.subr.mxu0 0.0
  %365 = vmatpush2.msra.mxu0 0.0
  %366 = vmatprep.subr.mxu0 0.0
  %367 = vmatpush2.msra.mxu0 0.0
  %368 = vmatprep.subr.mxu0 0.0
  %369 = vmatpush2.msra.mxu0 0.0
  %370 = vmatprep.subr.mxu0 0.0
  %371 = vmatpush2.msra.mxu0 0.0
  %372 = vmatprep.subr.mxu0 0.0
  %373 = vmatpush2.msra.mxu0 0.0
  %374 = vmatprep.mubr.f32.mxu0 0.0
  %375 = vmatmul.mubr.f32.gmra.mxu0 %v278
  %v376 = vpop.f32.mrf.mxu0
  %v377 = vadd.f32 0.0, %v376
  %v378 = vpop.f32.mrf.mxu0
  %379 = vmatprep.mubr.f32.mxu0 0.0
  %380 = vmatmul.mubr.f32.gmra.mxu0 %v279
  %v381 = vpop.f32.mrf.mxu0
  %v382 = vadd.f32 0.0, %v381
  %v383 = vpop.f32.mrf.mxu0
  %384 = vmatprep.mubr.f32.mxu0 0.0
  %385 = vmatmul.mubr.f32.gmra.mxu0 %v280
  %v386 = vpop.f32.mrf.mxu0
  %v387 = vadd.f32 0.0, %v386
  %v388 = vpop.f32.mrf.mxu0
  %389 = vmatprep.mubr.f32.mxu0 0.0
  %390 = vmatmul.mubr.f32.gmra.mxu0 %v281
  %v391 = vpop.f32.mrf.mxu0
  %v392 = vadd.f32 0.0, %v391
  %v393 = vpop.f32.mrf.mxu0
  %394 = vmatprep.mubr.f32.mxu0 0.0
  %395 = vmatmul.mubr.f32.gmra.mxu0 %v282
  %v396 = vpop.f32.mrf.mxu0
  %v397 = vadd.f32 0.0, %v396
  %v398 = vpop.f32.mrf.mxu0
  %399 = vmatprep.mubr.f32.mxu0 0.0
  %400 = vmatmul.mubr.f32.gmra.mxu0 %v283
  %v401 = vpop.f32.mrf.mxu0
  %v402 = vadd.f32 0.0, %v401
  %v403 = vpop.f32.mrf.mxu0
  %404 = vmatprep.mubr.f32.mxu0 0.0
  %405 = vmatmul.mubr.f32.gmra.mxu0 %v284
  %v406 = vpop.f32.mrf.mxu0
  %v407 = vadd.f32 0.0, %v406
  %v408 = vpop.f32.mrf.mxu0
  %409 = vmatprep.mubr.f32.mxu0 0.0
  %410 = vmatmul.mubr.f32.gmra.mxu0 %v285
  %v411 = vpop.f32.mrf.mxu0
  %v412 = vadd.f32 0.0, %v411
  %v413 = vpop.f32.mrf.mxu0
  %414 = vmatprep.mubr.f32.mxu0 0.0
  %415 = vmatmul.mubr.f32.gmra.mxu0 %v286
  %v416 = vpop.f32.mrf.mxu0
  %v417 = vadd.f32 0.0, %v416
  %v418 = vpop.f32.mrf.mxu0
  %419 = vmatprep.mubr.f32.mxu0 0.0
  %420 = vmatmul.mubr.f32.gmra.mxu0 %v287
  %v421 = vpop.f32.mrf.mxu0
  %v422 = vadd.f32 0.0, %v421
  %v423 = vpop.f32.mrf.mxu0
  %424 = vmatprep.mubr.f32.mxu0 0.0
  %425 = vmatmul.mubr.f32.gmra.mxu0 %v288
  %v426 = vpop.f32.mrf.mxu0
  %v427 = vadd.f32 0.0, %v426
  %v428 = vpop.f32.mrf.mxu0
  %429 = vmatprep.mubr.f32.mxu0 0.0
  %430 = vmatmul.mubr.f32.gmra.mxu0 %v289
  %v431 = vpop.f32.mrf.mxu0
  %v432 = vadd.f32 0.0, %v431
  %v433 = vpop.f32.mrf.mxu0
  %434 = vmatprep.mubr.f32.mxu0 0.0
  %435 = vmatmul.mubr.f32.gmra.mxu0 %v290
  %v436 = vpop.f32.mrf.mxu0
  %v437 = vadd.f32 0.0, %v436
  %v438 = vpop.f32.mrf.mxu0
  %439 = vmatprep.mubr.f32.mxu0 0.0
  %440 = vmatmul.mubr.f32.gmra.mxu0 %v291
  %v441 = vpop.f32.mrf.mxu0
  %v442 = vadd.f32 0.0, %v441
  %v443 = vpop.f32.mrf.mxu0
  %444 = vmatprep.mubr.f32.mxu0 0.0
  %445 = vmatmul.mubr.f32.gmra.mxu0 %v292
  %v446 = vpop.f32.mrf.mxu0
  %v447 = vadd.f32 0.0, %v446
  %v448 = vpop.f32.mrf.mxu0
  %449 = vmatprep.mubr.f32.mxu0 0.0
  %450 = vmatmul.mubr.f32.gmra.mxu0 %v293
  %v451 = vpop.f32.mrf.mxu0
  %v452 = vadd.f32 0.0, %v451
  %v453 = vpop.f32.mrf.mxu0
  %454 = vdwg.mxu0
  %v455 = vadd.f32 %v262, %v377
  %v456 = vadd.f32 %v263, %v382
  %v457 = vadd.f32 %v264, %v387
  %v458 = vadd.f32 %v265, %v392
  %v459 = vadd.f32 %v266, %v397
  %v460 = vadd.f32 %v267, %v402
  %v461 = vadd.f32 %v268, %v407
  %v462 = vadd.f32 %v269, %v412
  %v463 = vadd.f32 %v270, %v417
  %v464 = vadd.f32 %v271, %v422
  %v465 = vadd.f32 %v272, %v427
  %v466 = vadd.f32 %v273, %v432
  %v467 = vadd.f32 %v274, %v437
  %v468 = vadd.f32 %v275, %v442
  %v469 = vadd.f32 %v276, %v447
  %v470 = vadd.f32 %v277, %v452
  %471 = vst [vmem:[#allocation2] sm:$0xff] %v455
  %472 = vst [vmem:[#allocation2 + $0x8] sm:$0xff] %v456
  %473 = vst [vmem:[#allocation2 + $0x10] sm:$0xff] %v457
  %474 = vst [vmem:[#allocation2 + $0x18] sm:$0xff] %v458
  %475 = vst [vmem:[#allocation2 + $0x20] sm:$0xff] %v459
  %476 = vst [vmem:[#allocation2 + $0x28] sm:$0xff] %v460
  %477 = vst [vmem:[#allocation2 + $0x30] sm:$0xff] %v461
  %478 = vst [vmem:[#allocation2 + $0x38] sm:$0xff] %v462
  %479 = vst [vmem:[#allocation2 + $0x40] sm:$0xff] %v463
  %480 = vst [vmem:[#allocation2 + $0x48] sm:$0xff] %v464
  %481 = vst [vmem:[#allocation2 + $0x50] sm:$0xff] %v465
  %482 = vst [vmem:[#allocation2 + $0x58] sm:$0xff] %v466
  %483 = vst [vmem:[#allocation2 + $0x60] sm:$0xff] %v467
  %484 = vst [vmem:[#allocation2 + $0x68] sm:$0xff] %v468
  %485 = vst [vmem:[#allocation2 + $0x70] sm:$0xff] %v469
  %486 = vst [vmem:[#allocation2 + $0x78] sm:$0xff] %v470
  // Predicated region
  $region22: #{mm_plus_mm.1} parent=0 // pred_check
    %p487 = pneg %p17
  $region23: #{mm_plus_mm.1} parent=0 // pred_check_branch
    %489 = sbr.rel (%p487) target = $region25
  $region24: #{mm_plus_mm.1} parent=0 // pred_region
    %v490 = vld [vmem:[#allocation2] sm:$0xff]
    %v491 = vld [vmem:[#allocation2 + $0x8] sm:$0xff]
    %v492 = vld [vmem:[#allocation2 + $0x10] sm:$0xff]
    %v493 = vld [vmem:[#allocation2 + $0x18] sm:$0xff]
    %v494 = vld [vmem:[#allocation2 + $0x20] sm:$0xff]
    %v495 = vld [vmem:[#allocation2 + $0x28] sm:$0xff]
    %v496 = vld [vmem:[#allocation2 + $0x30] sm:$0xff]
    %v497 = vld [vmem:[#allocation2 + $0x38] sm:$0xff]
    %v498 = vld [vmem:[#allocation2 + $0x40] sm:$0xff]
    %v499 = vld [vmem:[#allocation2 + $0x48] sm:$0xff]
    %v500 = vld [vmem:[#allocation2 + $0x50] sm:$0xff]
    %v501 = vld [vmem:[#allocation2 + $0x58] sm:$0xff]
    %v502 = vld [vmem:[#allocation2 + $0x60] sm:$0xff]
    %v503 = vld [vmem:[#allocation2 + $0x68] sm:$0xff]
    %v504 = vld [vmem:[#allocation2 + $0x70] sm:$0xff]
    %v505 = vld [vmem:[#allocation2 + $0x78] sm:$0xff]
    %506 = vst [vmem:[%s4] sm:$0xff] %v490
    %507 = vst [vmem:[%s4 + $0x8] sm:$0xff] %v491
    %508 = vst [vmem:[%s4 + $0x10] sm:$0xff] %v492
    %509 = vst [vmem:[%s4 + $0x18] sm:$0xff] %v493
    %510 = vst [vmem:[%s4 + $0x20] sm:$0xff] %v494
    %511 = vst [vmem:[%s4 + $0x28] sm:$0xff] %v495
    %512 = vst [vmem:[%s4 + $0x30] sm:$0xff] %v496
    %513 = vst [vmem:[%s4 + $0x38] sm:$0xff] %v497
    %514 = vst [vmem:[%s4 + $0x40] sm:$0xff] %v498
    %515 = vst [vmem:[%s4 + $0x48] sm:$0xff] %v499
    %516 = vst [vmem:[%s4 + $0x50] sm:$0xff] %v500
    %517 = vst [vmem:[%s4 + $0x58] sm:$0xff] %v501
    %518 = vst [vmem:[%s4 + $0x60] sm:$0xff] %v502
    %519 = vst [vmem:[%s4 + $0x68] sm:$0xff] %v503
    %520 = vst [vmem:[%s4 + $0x70] sm:$0xff] %v504
    %521 = vst [vmem:[%s4 + $0x78] sm:$0xff] %v505
  $region25: #{mm_plus_mm.1} parent=0 // pred_fallthru
    _
  // Predicated region
  $region26: #{mm_plus_mm.1} parent=0 // pred_check
    _
  $region27: #{mm_plus_mm.1} parent=0 // pred_check_branch
    %523 = sbr.rel (0) target = $region29
  $region28: #{mm_plus_mm.1} parent=0 // pred_region
    _
  $region29: #{mm_plus_mm.1} parent=0 // pred_fallthru
    _
  // Predicated region
  $region30: #{mm_plus_mm.1} parent=0 // pred_check
    _
  $region31: #{mm_plus_mm.1} parent=0 // pred_check_branch
    %525 = sbr.rel (0) target = $region33
  $region32: #{mm_plus_mm.1} parent=0 // pred_region
    _
  $region33: #{mm_plus_mm.1} parent=0 // pred_fallthru
    _

</llo_original>
